<compile_context>
chip_gen: v6e
topology: v6e:2x2x1
jax: 0.10.0
libtpu: 0.0.40
codegen_flags: <defaults>
</compile_context>

<pallas_src>
import jax
import jax.numpy as jnp
from jax.experimental import pallas as pl
from jax.experimental.pallas import tpu as pltpu


def _round_up(n, m):
    return ((n + m - 1) // m) * m


def _cdiv(a, b):
    return (a + b - 1) // b


def _vmem_capacity_bytes():
    """Per-core VMEM capacity; falls back to 128 MiB if the query fails."""
    try:
        info = pltpu.get_tpu_info()
        cap = getattr(info, "vmem_capacity_bytes", None)
        if cap:
            return int(cap)
    except Exception:
        pass
    return 128 * 1024 * 1024


def _linear_lora_kernel(x_ref, w_ref, bias_ref, a_ref, b_ref, o_ref, acc_ref):
    """One (row_tile, tn) output block, accumulated over the K grid axis.

    acc += x_k @ Wt_{k,n} + (x_k @ A_k) @ B_n      (f32 accumulation)
    At the last K step: out = acc + bias_n (bias kept in f32).
    """
    k = pl.program_id(2)

    @pl.when(k == 0)
    def _init():
        acc_ref[...] = jnp.zeros_like(acc_ref)

    x = x_ref[...]
    # Frozen base linear partial (MXU).
    acc_ref[...] += jnp.dot(x, w_ref[...], preferred_element_type=jnp.float32)
    # LoRA partial: two chained skinny matmuls (alpha pre-folded into B).
    xa = jnp.dot(x, a_ref[...], preferred_element_type=jnp.float32)
    acc_ref[...] += jnp.dot(xa, b_ref[...].astype(jnp.float32),
                            preferred_element_type=jnp.float32)

    @pl.when(k == pl.num_programs(2) - 1)
    def _store():
        o_ref[...] = (acc_ref[...] + bias_ref[...]).astype(o_ref.dtype)


def prepare_linear_lora_params(W, bias, A, B, alpha, *,
                               compute_dtype=jnp.bfloat16):
    """One-time parameter prep (W is frozen; A/B change only at train steps):
    transpose W, pad feature axes to lane-dense multiples of 128, fold alpha
    into B, keep bias in f32."""
    out_dim, in_dim = W.shape
    rank = A.shape[1]
    assert A.shape == (in_dim, rank) and B.shape == (rank, out_dim)
    in_pad = _round_up(in_dim, 128)
    out_pad = _round_up(out_dim, 128)
    cdt = jnp.dtype(compute_dtype)

    w_t = W.T.astype(cdt)
    if (in_pad, out_pad) != (in_dim, out_dim):
        w_t = jnp.zeros((in_pad, out_pad), cdt).at[:in_dim, :out_dim].set(w_t)

    a_p = A.astype(cdt)
    if in_pad != in_dim:
        a_p = jnp.zeros((in_pad, rank), cdt).at[:in_dim, :].set(a_p)

    b_scaled = (jnp.float32(alpha) * B.astype(jnp.float32)).astype(cdt)
    if out_pad != out_dim:
        b_scaled = jnp.zeros((rank, out_pad), cdt).at[:, :out_dim].set(b_scaled)

    bias_p = jnp.zeros((1, out_pad), jnp.float32)
    if bias is not None:
        bias_p = bias_p.at[0, :out_dim].set(bias.astype(jnp.float32))

    return dict(w_t=w_t, bias=bias_p, a=a_p, b=b_scaled,
                in_dim=in_dim, out_dim=out_dim, rank=rank,
                in_pad=in_pad, out_pad=out_pad, compute_dtype=cdt)


def linear_with_lora_apply(x, params, *, row_tile=512, tn=512, tk=512):
    """Fused forward with pre-prepared parameters.  x: [..., in_dim]."""
    in_dim, out_dim = params["in_dim"], params["out_dim"]
    in_pad, out_pad, rank = params["in_pad"], params["out_pad"], params["rank"]
    cdt = params["compute_dtype"]

    *lead, x_in = x.shape
    assert x_in == in_dim
    rows = 1
    for d in lead:
        rows *= d
    out_dtype = x.dtype
    c_item = jnp.dtype(cdt).itemsize
    o_item = jnp.dtype(out_dtype).itemsize

    # --- generation-aware VMEM budget & tile selection ----------------------
    vmem_cap = _vmem_capacity_bytes()
    budget = (vmem_cap * 3) // 4            # ~96 MiB v5e/v6e, ~48 MiB v7x

    rows_p = _round_up(rows, 8)
    row_tile = min(_round_up(row_tile, 8), rows_p)
    tk = min(_round_up(tk, 128), in_pad)
    tn = min(_round_up(tn, 128), out_pad)

    def step_bytes(rt, tk_, tn_):
        return (rt * tn_ * 4                          # f32 accumulator scratch
                + 2 * rt * tk_ * c_item               # x tile (double-buffered)
                + 2 * tk_ * tn_ * c_item              # W^T block
                + 2 * tk_ * rank * c_item             # A block
                + 2 * rank * tn_ * c_item             # alpha*B block
                + 2 * tn_ * 4                         # bias block (f32)
                + 2 * rt * tn_ * o_item               # output tile
                + 3 * rt * tn_ * 4 + rt * rank * 4)   # in-kernel f32 temps

    while step_bytes(row_tile, tk, tn) > budget:
        if row_tile > 256:
            row_tile = _round_up(row_tile // 2, 8)
        elif tk > 128:
            tk //= 2
        elif tn > 128:
            tn //= 2
        elif row_tile > 8:
            row_tile = _round_up(row_tile // 2, 8)
        else:
            break

    m_tiles = _cdiv(rows_p, row_tile)
    n_tiles = _cdiv(out_pad, tn)
    k_tiles = _cdiv(in_pad, tk)

    # Keep both TensorCores busy on v7x: avoid a size-1 parallel grid.
    if m_tiles * n_tiles == 1 and row_tile > 8:
        row_tile = _round_up(row_tile // 2, 8)
        m_tiles = _cdiv(rows_p, row_tile)

    # --- activation layout: skip pad copies when already aligned ------------
    x2d = x.reshape(rows, in_dim)
    if rows_p != rows or in_pad != in_dim:
        x2d = jnp.zeros((rows_p, in_pad), cdt).at[:rows, :in_dim].set(
            x2d.astype(cdt))
    else:
        x2d = x2d.astype(cdt)

    # --- grid ordering -------------------------------------------------------
    n_outer = rows <= out_dim           # decode-ish: W is the bigger operand
    if n_outer:
        grid = (n_tiles, m_tiles, k_tiles)
        x_map = lambda n, m, k: (m, k)
        w_map = lambda n, m, k: (k, n)
        bias_map = lambda n, m, k: (0, n)
        a_map = lambda n, m, k: (k, 0)
        b_map = lambda n, m, k: (0, n)
        o_map = lambda n, m, k: (m, n)
    else:
        grid = (m_tiles, n_tiles, k_tiles)
        x_map = lambda m, n, k: (m, k)
        w_map = lambda m, n, k: (k, n)
        bias_map = lambda m, n, k: (0, n)
        a_map = lambda m, n, k: (k, 0)
        b_map = lambda m, n, k: (0, n)
        o_map = lambda m, n, k: (m, n)

    cost = pl.CostEstimate(
        flops=int(2 * rows_p * in_pad * out_pad
                  + 2 * rows_p * in_pad * rank * n_tiles
                  + 2 * rows_p * rank * out_pad * k_tiles),
        transcendentals=0,
        bytes_accessed=int(x2d.size * c_item * n_tiles
                           + params["w_t"].size * c_item * m_tiles
                           + params["a"].size * c_item
                           + params["b"].size * c_item
                           + params["bias"].size * 4
                           + rows_p * out_pad * o_item),
    )

    need = step_bytes(row_tile, tk, tn)
    vmem_limit = int(min(max(need + (16 << 20), 32 << 20),
                         vmem_cap - (8 << 20)))

    out2d = pl.pallas_call(
        _linear_lora_kernel,
        out_shape=jax.ShapeDtypeStruct((rows_p, out_pad), out_dtype),
        grid_spec=pltpu.PrefetchScalarGridSpec(
            num_scalar_prefetch=0,
            grid=grid,
            in_specs=[
                pl.BlockSpec((row_tile, tk), x_map),   # activations
                pl.BlockSpec((tk, tn), w_map),         # W^T block
                pl.BlockSpec((1, tn), bias_map),       # bias (f32)
                pl.BlockSpec((tk, rank), a_map),       # A block
                pl.BlockSpec((rank, tn), b_map),       # alpha*B block
            ],
            out_specs=pl.BlockSpec((row_tile, tn), o_map),
            scratch_shapes=[pltpu.VMEM((row_tile, tn), jnp.float32)],
        ),
        compiler_params=pltpu.CompilerParams(
            dimension_semantics=("parallel", "parallel", "arbitrary"),
            vmem_limit_bytes=vmem_limit,
        ),
        cost_estimate=cost,
    )(x2d, params["w_t"], params["bias"], params["a"], params["b"])

    if rows_p != rows or out_pad != out_dim:
        out2d = out2d[:rows, :out_dim]
    return out2d.reshape(tuple(lead) + (out_dim,))


def linear_with_lora_forward(x, W, bias, A, B, alpha, *,
                             compute_dtype=jnp.bfloat16, **kwargs):
    """Convenience wrapper: prepare params then apply.  For repeated calls,
    call prepare_linear_lora_params() once and reuse it."""
    params = prepare_linear_lora_params(W, bias, A, B, alpha,
                                        compute_dtype=compute_dtype)
    return linear_with_lora_apply(x, params, **kwargs)


if __name__ == "__main__":
    # Small config consistent with LinearWithLoRA(linear, rank, alpha).
    batch, seq = 2, 8
    in_dim, out_dim, rank, alpha = 32, 32, 4, 2.0

    key = jax.random.PRNGKey(0)
    kx, kw, kb, ka, kbr = jax.random.split(key, 5)

    # Frozen nn.Linear parameters.
    W = jax.random.normal(kw, (out_dim, in_dim), jnp.float32) / jnp.sqrt(
        jnp.float32(in_dim))
    bias = 0.1 * jax.random.normal(kb, (out_dim,), jnp.float32)

    # LoRALayer init: A = randn * 1/sqrt(rank), B = zeros.
    std_dev = 1.0 / jnp.sqrt(jnp.float32(rank))
    A = jax.random.normal(ka, (in_dim, rank), jnp.float32) * std_dev
    B = jnp.zeros((rank, out_dim), jnp.float32)

    x = jax.random.normal(kx, (batch, seq, in_dim), jnp.float32)

    def ref_fn(x, W, bias, A, B, alpha):
        return x @ W.T + bias + alpha * (x @ A @ B)

    # 1) Module-faithful init (B == 0): LoRA branch contributes zero (f32 path).
    out = jax.block_until_ready(
        linear_with_lora_forward(x, W, bias, A, B, alpha,
                                 compute_dtype=jnp.float32))
    ref = ref_fn(x, W, bias, A, B, alpha)
    assert out.shape == (batch, seq, out_dim)
    assert jnp.allclose(out, ref, atol=2e-2, rtol=2e-2)

    # 2) Non-zero B (as after training), f32 path.
    B_trained = 0.05 * jax.random.normal(kbr, (rank, out_dim), jnp.float32)
    out2 = jax.block_until_ready(
        linear_with_lora_forward(x, W, bias, A, B_trained, alpha,
                                 compute_dtype=jnp.float32))
    ref2 = ref_fn(x, W, bias, A, B_trained, alpha)
    assert jnp.allclose(out2, ref2, atol=2e-2, rtol=2e-2)

    # 3) Default bf16 compute path; params prepared once (hoisted) and reused.
    params = prepare_linear_lora_params(W, bias, A, B_trained, alpha)
    out3 = jax.block_until_ready(linear_with_lora_apply(x, params))
    assert out3.shape == (batch, seq, out_dim)
    assert jnp.allclose(out3.astype(jnp.float32), ref2, atol=1e-1, rtol=1e-1)

    print("KERNEL_OK")
</pallas_src>

<mosaic_0001>
module attributes {stable_mosaic.version = 11 : i64} {
  func.func @_linear_lora_kernel(%arg0: i32, %arg1: i32, %arg2: i32, %arg3: memref<8x128xf32, #tpu.memory_space<vmem>>, %arg4: memref<128x128xf32, #tpu.memory_space<vmem>>, %arg5: memref<1x128xf32, #tpu.memory_space<vmem>>, %arg6: memref<128x4xf32, #tpu.memory_space<vmem>>, %arg7: memref<4x128xf32, #tpu.memory_space<vmem>>, %arg8: memref<8x128xf32, #tpu.memory_space<vmem>>, %arg9: memref<8x128xf32, #tpu.memory_space<vmem>>) attributes {dimension_semantics = [#tpu.dimension_semantics<parallel>, #tpu.dimension_semantics<parallel>, #tpu.dimension_semantics<arbitrary>], iteration_bounds = array<i64: 1, 2, 1>, scalar_prefetch = 0 : i64, scratch_operands = 1 : i64, tpu.core_type = #tpu.core_type<tc>, window_params = [{transform_indices = @transform_0, window_bounds = array<i64: 8, 128>}, {transform_indices = @transform_1, window_bounds = array<i64: 128, 128>}, {transform_indices = @transform_2, window_bounds = array<i64: 1, 128>}, {transform_indices = @transform_3, window_bounds = array<i64: 128, 4>}, {transform_indices = @transform_4, window_bounds = array<i64: 4, 128>}, {transform_indices = @transform_5, window_bounds = array<i64: 8, 128>}]} {
    %c0_i32 = arith.constant 0 : i32
    %0 = arith.cmpi eq, %arg2, %c0_i32 : i32
    %1 = arith.extui %0 : i1 to i32
    %c0_i32_0 = arith.constant 0 : i32
    %2 = arith.cmpi ne, %1, %c0_i32_0 : i32
    scf.if %2 {
      %cst_20 = arith.constant 0.000000e+00 : f32
      %19 = vector.broadcast %cst_20 : f32 to vector<8x128xf32>
      %c0_21 = arith.constant 0 : index
      %c0_22 = arith.constant 0 : index
      %20 = vector.load %arg9[%c0_21, %c0_22] : memref<8x128xf32, #tpu.memory_space<vmem>>, vector<8x128xf32>
      tpu.vector_store %arg9[%c0_21, %c0_22], %19 {strides = array<i32>} : memref<8x128xf32, #tpu.memory_space<vmem>>, vector<8x128xf32>,
    } else {
    }
    %c0 = arith.constant 0 : index
    %c0_1 = arith.constant 0 : index
    %3 = vector.load %arg3[%c0, %c0_1] : memref<8x128xf32, #tpu.memory_space<vmem>>, vector<8x128xf32>
    %c0_2 = arith.constant 0 : index
    %c0_3 = arith.constant 0 : index
    %4 = vector.load %arg9[%c0_2, %c0_3] : memref<8x128xf32, #tpu.memory_space<vmem>>, vector<8x128xf32>
    %c0_4 = arith.constant 0 : index
    %c0_5 = arith.constant 0 : index
    %5 = vector.load %arg4[%c0_4, %c0_5] : memref<128x128xf32, #tpu.memory_space<vmem>>, vector<128x128xf32>
    %cst = arith.constant dense<0.000000e+00> : vector<8x128xf32>
    %6 = tpu.matmul %3, %5, %cst {dimension_numbers = #tpu.dot_dimension_numbers<[1], [0], [0], [1], [0, 0, 1, 1], [], []>} : vector<8x128xf32>, vector<128x128xf32>, vector<8x128xf32> -> vector<8x128xf32>
    %7 = arith.addf %4, %6 : vector<8x128xf32>
    %c0_6 = arith.constant 0 : index
    %c0_7 = arith.constant 0 : index
    %8 = vector.load %arg9[%c0_6, %c0_7] : memref<8x128xf32, #tpu.memory_space<vmem>>, vector<8x128xf32>
    tpu.vector_store %arg9[%c0_6, %c0_7], %7 {strides = array<i32>} : memref<8x128xf32, #tpu.memory_space<vmem>>, vector<8x128xf32>,
    %c0_8 = arith.constant 0 : index
    %c0_9 = arith.constant 0 : index
    %9 = vector.load %arg6[%c0_8, %c0_9] : memref<128x4xf32, #tpu.memory_space<vmem>>, vector<128x4xf32>
    %cst_10 = arith.constant dense<0.000000e+00> : vector<8x4xf32>
    %10 = tpu.matmul %3, %9, %cst_10 {dimension_numbers = #tpu.dot_dimension_numbers<[1], [0], [0], [1], [0, 0, 1, 1], [], []>} : vector<8x128xf32>, vector<128x4xf32>, vector<8x4xf32> -> vector<8x4xf32>
    %c0_11 = arith.constant 0 : index
    %c0_12 = arith.constant 0 : index
    %11 = vector.load %arg9[%c0_11, %c0_12] : memref<8x128xf32, #tpu.memory_space<vmem>>, vector<8x128xf32>
    %c0_13 = arith.constant 0 : index
    %c0_14 = arith.constant 0 : index
    %12 = vector.load %arg7[%c0_13, %c0_14] : memref<4x128xf32, #tpu.memory_space<vmem>>, vector<4x128xf32>
    %cst_15 = arith.constant dense<0.000000e+00> : vector<8x128xf32>
    %13 = tpu.matmul %10, %12, %cst_15 {dimension_numbers = #tpu.dot_dimension_numbers<[1], [0], [0], [1], [0, 0, 1, 1], [], []>} : vector<8x4xf32>, vector<4x128xf32>, vector<8x128xf32> -> vector<8x128xf32>
    %14 = arith.addf %11, %13 : vector<8x128xf32>
    %c0_16 = arith.constant 0 : index
    %c0_17 = arith.constant 0 : index
    %15 = vector.load %arg9[%c0_16, %c0_17] : memref<8x128xf32, #tpu.memory_space<vmem>>, vector<8x128xf32>
    tpu.vector_store %arg9[%c0_16, %c0_17], %14 {strides = array<i32>} : memref<8x128xf32, #tpu.memory_space<vmem>>, vector<8x128xf32>,
    %c0_i32_18 = arith.constant 0 : i32
    %16 = arith.cmpi eq, %arg2, %c0_i32_18 : i32
    %17 = arith.extui %16 : i1 to i32
    %c0_i32_19 = arith.constant 0 : i32
    %18 = arith.cmpi ne, %17, %c0_i32_19 : i32
    scf.if %18 {
      %c0_20 = arith.constant 0 : index
      %c0_21 = arith.constant 0 : index
      %19 = vector.load %arg9[%c0_20, %c0_21] : memref<8x128xf32, #tpu.memory_space<vmem>>, vector<8x128xf32>
      %c0_22 = arith.constant 0 : index
      %c0_23 = arith.constant 0 : index
      %20 = vector.load %arg5[%c0_22, %c0_23] : memref<1x128xf32, #tpu.memory_space<vmem>>, vector<1x128xf32>
      %21 = vector.broadcast %20 : vector<1x128xf32> to vector<8x128xf32>
      %22 = arith.addf %19, %21 : vector<8x128xf32>
      %c0_24 = arith.constant 0 : index
      %c0_25 = arith.constant 0 : index
      %23 = vector.load %arg8[%c0_24, %c0_25] : memref<8x128xf32, #tpu.memory_space<vmem>>, vector<8x128xf32>
      tpu.vector_store %arg8[%c0_24, %c0_25], %22 {strides = array<i32>} : memref<8x128xf32, #tpu.memory_space<vmem>>, vector<8x128xf32>,
    } else {
    }
    return
  }
  func.func @transform_0(%arg0: i32, %arg1: i32, %arg2: i32) -> (i32, i32) {
    %c0_i32 = arith.constant 0 : i32
    return %arg1, %arg2 : i32, i32
  }
  func.func @transform_1(%arg0: i32, %arg1: i32, %arg2: i32) -> (i32, i32) {
    %c0_i32 = arith.constant 0 : i32
    return %arg2, %arg0 : i32, i32
  }
  func.func @transform_2(%arg0: i32, %arg1: i32, %arg2: i32) -> (i32, i32) {
    %c0_i32 = arith.constant 0 : i32
    %c0_i32_0 = arith.constant 0 : i32
    return %c0_i32, %arg0 : i32, i32
  }
  func.func @transform_3(%arg0: i32, %arg1: i32, %arg2: i32) -> (i32, i32) {
    %c0_i32 = arith.constant 0 : i32
    %c0_i32_0 = arith.constant 0 : i32
    return %arg2, %c0_i32 : i32, i32
  }
  func.func @transform_4(%arg0: i32, %arg1: i32, %arg2: i32) -> (i32, i32) {
    %c0_i32 = arith.constant 0 : i32
    %c0_i32_0 = arith.constant 0 : i32
    return %c0_i32, %arg0 : i32, i32
  }
  func.func @transform_5(%arg0: i32, %arg1: i32, %arg2: i32) -> (i32, i32) {
    %c0_i32 = arith.constant 0 : i32
    return %arg1, %arg0 : i32, i32
  }
}

</mosaic_0001>

<llo_original>
// kernel: tpu_custom_call.1
$region0: #{tpu_custom_call.1}
  #allocation0 [shape = 'u32[]', space=smem, size = 0x4, offset = 0x4, fixed_abs, tag = 'smem constant byte address 0x4 - core index']
  #allocation1 [shape = 'u32[144,128]{1,0:T(1,128)}', space=vmem, size = 0x12000, scoped, tag = 'internal scratch']
  #allocation2 [shape = 'f32[8,128]{1,0:T(8,128)}', space=vmem, size = 0x1000, scoped, tag = 'scratch operand']
  %s0 = inlined_call_operand.hbm [shape: f32[16,128], index: 0, kind: input, shape index: {}]
  %s1 = inlined_call_operand.vmem [shape: f32[128,128], index: 1, kind: input, shape index: {}]
  %s2 = inlined_call_operand.vmem [shape: f32[1,128], index: 2, kind: input, shape index: {}]
  %s3 = inlined_call_operand.vmem [shape: f32[128,4], index: 3, kind: input, shape index: {}]
  %s4 = inlined_call_operand.vmem [shape: f32[4,128], index: 4, kind: input, shape index: {}]
  %s5 = inlined_call_operand.hbm [shape: f32[16,128], index: 5, kind: output, shape index: {}]
  %s6 = sld [smem:[#allocation0]]
  $region65: #{tpu_custom_call.1} parent=0
    _
  %s8 = ssub.s32 1, %s6
  %s9 = scalar_select 0, %s8, %s6
  $region1: #{tpu_custom_call.1} parent=0
    #allocation3 [shape = 'u8[8192]{0}', space=vmem, size = 0x2000, scoped, tag = 'input window, operand 0']
    #allocation4 [shape = 's32[2]{0}', space=sflag, size = 0x8, scoped, tag = 'scoped memory for tpu_custom_call.1']
    #allocation5 [shape = 's32[2]{0}', space=sflag, size = 0x8, scoped, tag = 'scoped memory for tpu_custom_call.1']
    #allocation6 [shape = 'u8[8192]{0}', space=vmem, size = 0x2000, scoped, tag = 'output window, operand 0']
    %10 = vsyncpa [#allocation4], 0
    %s11 = scalar_lea.sflag [#allocation4], 1
    %12 = vsyncpa %s11, 0
    %13 = vsyncpa [#allocation5], 0
    %s14 = scalar_lea.sflag [#allocation5], 1
    %15 = vsyncpa %s14, 0
    loop: start=0, step=1, limit=4
    $region2: #{tpu_custom_call.1} parent=1 // loop_pre_header
      _
    $region3: #{tpu_custom_call.1} parent=1 // loop_header
      %s17 = sphi 0, %s21
      %p18 = scmp.ge.s32.totalorder %s17, 4
      %s24 = sphi 0, %s43
      %s25 = sphi 0, %s39
      %s26 = sphi 0, %s35
      %s27 = sphi 0, %s24
      %s28 = sphi 0, %s25
      %s29 = sphi 0, %s26
      %s30 = sphi 0, %s27
      %s31 = sphi 0, %s28
      %s32 = sphi 0, %s29
      %s48 = sphi 0, %s50
      %s51 = sphi 0, %s48
      %s52 = sphi 0, %s51
      %s68 = sphi 0, %s52
      %s76 = sphi 0, %s78
      %s79 = sphi 0, %s76
      %s80 = sphi 0, %s79
      %s96 = sphi 0, %s80
      %s102 = sphi 0, %s104
      %s105 = sphi 0, %s102
      %s106 = sphi 0, %s105
      %s122 = sphi 0, %s106
      %s128 = sphi 0, %s130
      %s131 = sphi 0, %s128
      %s132 = sphi 0, %s131
      %s148 = sphi 0, %s132
      %s154 = sphi 0, %s156
      %s157 = sphi 0, %s154
      %s158 = sphi 0, %s157
      %s174 = sphi 0, %s158
      %s182 = sphi 0, %s184
      %s185 = sphi 0, %s182
      %s186 = sphi 0, %s185
      %s202 = sphi 0, %s186
    $region4: #{tpu_custom_call.1} parent=1 // loop_header_branch
      %20 = sbr.rel (%p18) target = $region8
    $region5: #{tpu_custom_call.1} parent=1 // loop_body
      %s22 = ssub.s32 %s17, 1
      %s23 = ssub.s32 %s17, 2
      %s33 = sadd.s32 1, %s26
      %p34 = scmp.ge.s32.totalorder %s33, 1
      %s35 = scalar_select %p34, 0, %s33
      %s36 = sadd.s32 1, %s25
      %s37 = scalar_select %p34, %s36, %s25
      %p38 = scmp.ge.s32.totalorder %s37, 2
      %s39 = scalar_select %p38, 0, %s37
      %s40 = sadd.s32 1, %s24
      %s41 = scalar_select %p38, %s40, %s24
      %p42 = scmp.ge.s32.totalorder %s41, 1
      %s43 = scalar_select %p42, 0, %s41
      %s44 = ssub.s32 %s25, %s39
      %s45 = ssub.s32 %s26, %s35
      %s46 = sor.u32 %s44, %s45
      %p47 = scmp.eq.s32.totalorder %s46, 0
      %s49 = sadd.s32 %s48, 1
      %s50 = scalar_select %p47, %s48, %s49
      %p53 = pneg %p47
      %p54 = scmp.eq.s32.totalorder %s17, 1
      %p55 = por %p53, %p54
      %p56 = scmp.ne.s32.totalorder %s48, %s51
      %p57 = scmp.eq.s32.totalorder %s17, 0
      %p58 = por %p56, %p57
      %p59 = scmp.ne.s32.totalorder %s48, %s51
      %p60 = scmp.eq.s32.totalorder %s22, 1
      %p61 = por %p59, %p60
      %p62 = scmp.ne.s32.totalorder %s51, %s52
      %p63 = scmp.eq.s32.totalorder %s22, 0
      %p64 = por %p62, %p63
      %p65 = scmp.ne.s32.totalorder %s51, %s52
      %p66 = scmp.eq.s32.totalorder %s23, 1
      %p67 = por %p65, %p66
      %p69 = scmp.ne.s32.totalorder %s52, %s68
      %p70 = scmp.eq.s32.totalorder %s23, 0
      %p71 = por %p69, %p70
      %s72 = ssub.s32 %s26, %s35
      %s73 = ssub.s32 %s24, %s43
      %s74 = sor.u32 %s72, %s73
      %p75 = scmp.eq.s32.totalorder %s74, 0
      %s77 = sadd.s32 %s76, 1
      %s78 = scalar_select %p75, %s76, %s77
      %p81 = pneg %p75
      %p82 = scmp.eq.s32.totalorder %s17, 1
      %p83 = por %p81, %p82
      %p84 = scmp.ne.s32.totalorder %s76, %s79
      %p85 = scmp.eq.s32.totalorder %s17, 0
      %p86 = por %p84, %p85
      %p87 = scmp.ne.s32.totalorder %s76, %s79
      %p88 = scmp.eq.s32.totalorder %s22, 1
      %p89 = por %p87, %p88
      %p90 = scmp.ne.s32.totalorder %s79, %s80
      %p91 = scmp.eq.s32.totalorder %s22, 0
      %p92 = por %p90, %p91
      %p93 = scmp.ne.s32.totalorder %s79, %s80
      %p94 = scmp.eq.s32.totalorder %s23, 1
      %p95 = por %p93, %p94
      %p97 = scmp.ne.s32.totalorder %s80, %s96
      %p98 = scmp.eq.s32.totalorder %s23, 0
      %p99 = por %p97, %p98
      %s100 = ssub.s32 %s24, %s43
      %p101 = scmp.eq.s32.totalorder %s100, 0
      %s103 = sadd.s32 %s102, 1
      %s104 = scalar_select %p101, %s102, %s103
      %p107 = pneg %p101
      %p108 = scmp.eq.s32.totalorder %s17, 1
      %p109 = por %p107, %p108
      %p110 = scmp.ne.s32.totalorder %s102, %s105
      %p111 = scmp.eq.s32.totalorder %s17, 0
      %p112 = por %p110, %p111
      %p113 = scmp.ne.s32.totalorder %s102, %s105
      %p114 = scmp.eq.s32.totalorder %s22, 1
      %p115 = por %p113, %p114
      %p116 = scmp.ne.s32.totalorder %s105, %s106
      %p117 = scmp.eq.s32.totalorder %s22, 0
      %p118 = por %p116, %p117
      %p119 = scmp.ne.s32.totalorder %s105, %s106
      %p120 = scmp.eq.s32.totalorder %s23, 1
      %p121 = por %p119, %p120
      %p123 = scmp.ne.s32.totalorder %s106, %s122
      %p124 = scmp.eq.s32.totalorder %s23, 0
      %p125 = por %p123, %p124
      %s126 = ssub.s32 %s26, %s35
      %p127 = scmp.eq.s32.totalorder %s126, 0
      %s129 = sadd.s32 %s128, 1
      %s130 = scalar_select %p127, %s128, %s129
      %p133 = pneg %p127
      %p134 = scmp.eq.s32.totalorder %s17, 1
      %p135 = por %p133, %p134
      %p136 = scmp.ne.s32.totalorder %s128, %s131
      %p137 = scmp.eq.s32.totalorder %s17, 0
      %p138 = por %p136, %p137
      %p139 = scmp.ne.s32.totalorder %s128, %s131
      %p140 = scmp.eq.s32.totalorder %s22, 1
      %p141 = por %p139, %p140
      %p142 = scmp.ne.s32.totalorder %s131, %s132
      %p143 = scmp.eq.s32.totalorder %s22, 0
      %p144 = por %p142, %p143
      %p145 = scmp.ne.s32.totalorder %s131, %s132
      %p146 = scmp.eq.s32.totalorder %s23, 1
      %p147 = por %p145, %p146
      %p149 = scmp.ne.s32.totalorder %s132, %s148
      %p150 = scmp.eq.s32.totalorder %s23, 0
      %p151 = por %p149, %p150
      %s152 = ssub.s32 %s24, %s43
      %p153 = scmp.eq.s32.totalorder %s152, 0
      %s155 = sadd.s32 %s154, 1
      %s156 = scalar_select %p153, %s154, %s155
      %p159 = pneg %p153
      %p160 = scmp.eq.s32.totalorder %s17, 1
      %p161 = por %p159, %p160
      %p162 = scmp.ne.s32.totalorder %s154, %s157
      %p163 = scmp.eq.s32.totalorder %s17, 0
      %p164 = por %p162, %p163
      %p165 = scmp.ne.s32.totalorder %s154, %s157
      %p166 = scmp.eq.s32.totalorder %s22, 1
      %p167 = por %p165, %p166
      %p168 = scmp.ne.s32.totalorder %s157, %s158
      %p169 = scmp.eq.s32.totalorder %s22, 0
      %p170 = por %p168, %p169
      %p171 = scmp.ne.s32.totalorder %s157, %s158
      %p172 = scmp.eq.s32.totalorder %s23, 1
      %p173 = por %p171, %p172
      %p175 = scmp.ne.s32.totalorder %s158, %s174
      %p176 = scmp.eq.s32.totalorder %s23, 0
      %p177 = por %p175, %p176
      %s178 = ssub.s32 %s25, %s39
      %s179 = ssub.s32 %s24, %s43
      %s180 = sor.u32 %s178, %s179
      %p181 = scmp.eq.s32.totalorder %s180, 0
      %s183 = sadd.s32 %s182, 1
      %s184 = scalar_select %p181, %s182, %s183
      %p187 = pneg %p181
      %p188 = scmp.eq.s32.totalorder %s17, 1
      %p189 = por %p187, %p188
      %p190 = scmp.ne.s32.totalorder %s182, %s185
      %p191 = scmp.eq.s32.totalorder %s17, 0
      %p192 = por %p190, %p191
      %p193 = scmp.ne.s32.totalorder %s182, %s185
      %p194 = scmp.eq.s32.totalorder %s22, 1
      %p195 = por %p193, %p194
      %p196 = scmp.ne.s32.totalorder %s185, %s186
      %p197 = scmp.eq.s32.totalorder %s22, 0
      %p198 = por %p196, %p197
      %p199 = scmp.ne.s32.totalorder %s185, %s186
      %p200 = scmp.eq.s32.totalorder %s23, 1
      %p201 = por %p199, %p200
      %p203 = scmp.ne.s32.totalorder %s186, %s202
      %p204 = scmp.eq.s32.totalorder %s23, 0
      %p205 = por %p203, %p204
      %p206 = scmp.le.s32.totalorder 1, %s17
      %p207 = scmp.lt.s32.totalorder %s17, 3
      %p208 = pnand %p206, %p207
      %p209 = pneg %p208
      // Predicated region
      $region9: #{tpu_custom_call.1} parent=5 // pred_check
        _
      $region10: #{tpu_custom_call.1} parent=5 // pred_check_branch
        %211 = sbr.rel (%p208) target = $region12
      $region11: #{tpu_custom_call.1} parent=5 // pred_region
        %s212 = ssub.s32 %s17, 1
        // Predicated region
        $region13: #{tpu_custom_call.1} parent=11 // pred_check
          %p213 = pneg %p92
        $region14: #{tpu_custom_call.1} parent=11 // pred_check_branch
          %215 = sbr.rel (%p213) target = $region16
        $region15: #{tpu_custom_call.1} parent=11 // pred_region
          %s216 = smul.u32 16, %s29
          %p217 = scmp.lt.s32.totalorder %s216, 15
          %s218 = scalar_select %p217, %s216, 15
          %p219 = scmp.lt.s32.totalorder %s27, 0
          %s220 = scalar_select %p219, %s27, 0
          %s221 = sadd.s32 %s220, %s218
          %s222 = smul.addr %s221, 8
          %s223 = scalar_lea.vmem %s1, %s222
          %s224 = smul.u32 16, %s29
        $region16: #{tpu_custom_call.1} parent=11 // pred_fallthru
          _
        // Predicated region
        $region17: #{tpu_custom_call.1} parent=11 // pred_check
          %p225 = pneg %p118
        $region18: #{tpu_custom_call.1} parent=11 // pred_check_branch
          %227 = sbr.rel (%p225) target = $region20
        $region19: #{tpu_custom_call.1} parent=11 // pred_region
          %p228 = scmp.lt.s32.totalorder %s27, 0
          %s229 = scalar_select %p228, %s27, 0
          %s230 = scalar_lea.vmem %s2, %s229
        $region20: #{tpu_custom_call.1} parent=11 // pred_fallthru
          _
        // Predicated region
        $region21: #{tpu_custom_call.1} parent=11 // pred_check
          %p231 = pneg %p144
        $region22: #{tpu_custom_call.1} parent=11 // pred_check_branch
          %233 = sbr.rel (%p231) target = $region24
        $region23: #{tpu_custom_call.1} parent=11 // pred_region
          %s234 = smul.u32 16, %s29
          %p235 = scmp.lt.s32.totalorder %s234, 15
          %s236 = scalar_select %p235, %s234, 15
          %s237 = smul.addr %s236, 8
          %s238 = scalar_lea.vmem %s3, %s237
          %s239 = smul.u32 16, %s29
        $region24: #{tpu_custom_call.1} parent=11 // pred_fallthru
          _
        // Predicated region
        $region25: #{tpu_custom_call.1} parent=11 // pred_check
          %p240 = pneg %p170
        $region26: #{tpu_custom_call.1} parent=11 // pred_check_branch
          %242 = sbr.rel (%p240) target = $region28
        $region27: #{tpu_custom_call.1} parent=11 // pred_region
          %p243 = scmp.lt.s32.totalorder %s27, 0
          %s244 = scalar_select %p243, %s27, 0
          %s245 = smul.addr %s244, 4
          %s246 = scalar_lea.vmem %s4, %s245
        $region28: #{tpu_custom_call.1} parent=11 // pred_fallthru
          _
      $region12: #{tpu_custom_call.1} parent=5 // pred_fallthru
        _
      %p247 = scmp.lt.s32.totalorder %s17, 2
      // Predicated region
      $region29: #{tpu_custom_call.1} parent=5 // pred_check
        %p248 = pneg %p247
      $region30: #{tpu_custom_call.1} parent=5 // pred_check_branch
        %250 = sbr.rel (%p248) target = $region32
      $region31: #{tpu_custom_call.1} parent=5 // pred_region
        // Predicated region
        $region33: #{tpu_custom_call.1} parent=31 // pred_check
          %p251 = pneg %p58
        $region34: #{tpu_custom_call.1} parent=31 // pred_check_branch
          %253 = sbr.rel (%p251) target = $region36
        $region35: #{tpu_custom_call.1} parent=31 // pred_region
          %s254 = sand.u32 %s48, 1
          %s255 = scalar_lea.sflag [#allocation4], %s254
          %s256 = sand.u32 %s48, 1
          %s257 = smul.addr %s256, 8
          %s258 = scalar_lea.vmem [#allocation3], %s257
          %s260 = ssub.s32 128, 128
          %261 = vsyncadd %s255, %s260
          %s262 = sadd.s32 %s26, %s25
          %s263 = smul.addr %s262, 128
          %s264 = scalar_lea.hbm %s0, %s263
          %s266 = sshll.u32 %s258, 4
          %s267 = int_to_ptr.vmem [resolvable:$true] %s266
          %269 = dma.hbm_to_vmem [thread:$0]  %s264, 128, %s267, %s255
        $region36: #{tpu_custom_call.1} parent=31 // pred_fallthru
          _
      $region32: #{tpu_custom_call.1} parent=5 // pred_fallthru
        _
      %p270 = scmp.le.s32.totalorder 1, %s17
      %p271 = scmp.lt.s32.totalorder %s17, 3
      %p272 = pnand %p270, %p271
      %p273 = pneg %p272
      // Predicated region
      $region37: #{tpu_custom_call.1} parent=5 // pred_check
        _
      $region38: #{tpu_custom_call.1} parent=5 // pred_check_branch
        %275 = sbr.rel (%p272) target = $region40
      $region39: #{tpu_custom_call.1} parent=5 // pred_region
        %s276 = ssub.s32 %s17, 1
        %s277 = sand.u32 %s51, 1
        %s278 = scalar_lea.sflag [#allocation4], %s277
        %s279 = sand.u32 %s51, 1
        %s280 = smul.addr %s279, 8
        %s281 = scalar_lea.vmem [#allocation3], %s280
        // Predicated region
        $region41: #{tpu_custom_call.1} parent=39 // pred_check
          %p282 = pneg %p64
        $region42: #{tpu_custom_call.1} parent=39 // pred_check_branch
          %284 = sbr.rel (%p282) target = $region44
        $region43: #{tpu_custom_call.1} parent=39 // pred_region
          %285 = dma.done %s278, 128
        $region44: #{tpu_custom_call.1} parent=39 // pred_fallthru
          _
        %s286 = sand.u32 %s51, 1
        %s287 = scalar_lea.sflag [#allocation4], %s286
        %s288 = sand.u32 %s51, 1
        %s289 = smul.addr %s288, 8
        %s290 = scalar_lea.vmem [#allocation3], %s289
        %p291 = pneg %p64
        %p292 = pneg %p61
        %s293 = smul.u32 16, %s29
        %p294 = scmp.lt.s32.totalorder %s293, 15
        %s295 = scalar_select %p294, %s293, 15
        %p296 = scmp.lt.s32.totalorder %s27, 0
        %s297 = scalar_select %p296, %s27, 0
        %s298 = sadd.s32 %s297, %s295
        %s299 = smul.addr %s298, 8
        %s300 = scalar_lea.vmem %s1, %s299
        %p301 = pneg %p92
        %p302 = pneg %p89
        %p303 = scmp.lt.s32.totalorder %s27, 0
        %s304 = scalar_select %p303, %s27, 0
        %s305 = scalar_lea.vmem %s2, %s304
        %p306 = pneg %p118
        %p307 = pneg %p115
        %s308 = smul.u32 16, %s29
        %p309 = scmp.lt.s32.totalorder %s308, 15
        %s310 = scalar_select %p309, %s308, 15
        %s311 = smul.addr %s310, 8
        %s312 = scalar_lea.vmem %s3, %s311
        %p313 = pneg %p144
        %p314 = pneg %p141
        %p315 = scmp.lt.s32.totalorder %s27, 0
        %s316 = scalar_select %p315, %s27, 0
        %s317 = smul.addr %s316, 4
        %s318 = scalar_lea.vmem %s4, %s317
        %p319 = pneg %p170
        %p320 = pneg %p167
        %p321 = pneg %p198
        %p322 = pneg %p195
        %s323 = sand.u32 %s185, 1
        %s324 = scalar_lea.sflag [#allocation5], %s323
        %s325 = sand.u32 %s185, 1
        %s326 = smul.addr %s325, 8
        %s327 = scalar_lea.vmem [#allocation6], %s326
        %s328 = smul.u32 16, %s29
        %p329 = scmp.lt.s32.totalorder %s328, 15
        %s330 = scalar_select %p329, %s328, 15
        %p331 = scmp.lt.s32.totalorder %s27, 0
        %s332 = scalar_select %p331, %s27, 0
        %s333 = sadd.s32 %s332, %s330
        %s334 = smul.addr %s333, 8
        %s335 = scalar_lea.vmem %s1, %s334
        %s336 = smul.u32 16, %s29
        %p337 = scmp.lt.s32.totalorder %s27, 0
        %s338 = scalar_select %p337, %s27, 0
        %s339 = scalar_lea.vmem %s2, %s338
        %s340 = smul.u32 16, %s29
        %p341 = scmp.lt.s32.totalorder %s340, 15
        %s342 = scalar_select %p341, %s340, 15
        %s343 = smul.addr %s342, 8
        %s344 = scalar_lea.vmem %s3, %s343
        %s345 = smul.u32 16, %s29
        %p346 = scmp.lt.s32.totalorder %s27, 0
        %s347 = scalar_select %p346, %s27, 0
        %s348 = smul.addr %s347, 4
        %s349 = scalar_lea.vmem %s4, %s348
        %p350 = scmp.eq.s32.totalorder %s29, 0
        // Predicated region
        $region45: #{tpu_custom_call.1} parent=39 // pred_check
          %p351 = pneg %p350
        $region46: #{tpu_custom_call.1} parent=39 // pred_check_branch
          %353 = sbr.rel (%p351) target = $region48
        $region47: #{tpu_custom_call.1} parent=39 // pred_region
          %354 = vst [vmem:[#allocation2] sm:$0xff] 0.0
        $region48: #{tpu_custom_call.1} parent=39 // pred_fallthru
          _
        %v355 = vld [vmem:[%s281] sm:$0xff]
        %v356 = vld [vmem:[#allocation2] sm:$0xff]
        %v357 = vld [vmem:[%s335] sm:$0xff]
        %v358 = vld [vmem:[%s335 + $0x8] sm:$0xff]
        %v359 = vld [vmem:[%s335 + $0x10] sm:$0xff]
        %v360 = vld [vmem:[%s335 + $0x18] sm:$0xff]
        %v361 = vld [vmem:[%s335 + $0x20] sm:$0xff]
        %v362 = vld [vmem:[%s335 + $0x28] sm:$0xff]
        %v363 = vld [vmem:[%s335 + $0x30] sm:$0xff]
        %v364 = vld [vmem:[%s335 + $0x38] sm:$0xff]
        %v365 = vld [vmem:[%s335 + $0x40] sm:$0xff]
        %v366 = vld [vmem:[%s335 + $0x48] sm:$0xff]
        %v367 = vld [vmem:[%s335 + $0x50] sm:$0xff]
        %v368 = vld [vmem:[%s335 + $0x58] sm:$0xff]
        %v369 = vld [vmem:[%s335 + $0x60] sm:$0xff]
        %v370 = vld [vmem:[%s335 + $0x68] sm:$0xff]
        %v371 = vld [vmem:[%s335 + $0x70] sm:$0xff]
        %v372 = vld [vmem:[%s335 + $0x78] sm:$0xff]
        %373 = vmatprep.subr.mxu0 0.0
        %374 = vmatpush1.msra.mxu0 %v372
        %375 = vmatprep.subr.mxu0 0.0
        %376 = vmatpush1.msra.mxu0 %v371
        %377 = vmatprep.subr.mxu0 0.0
        %378 = vmatpush1.msra.mxu0 %v370
        %379 = vmatprep.subr.mxu0 0.0
        %380 = vmatpush1.msra.mxu0 %v369
        %381 = vmatprep.subr.mxu0 0.0
        %382 = vmatpush1.msra.mxu0 %v368
        %383 = vmatprep.subr.mxu0 0.0
        %384 = vmatpush1.msra.mxu0 %v367
        %385 = vmatprep.subr.mxu0 0.0
        %386 = vmatpush1.msra.mxu0 %v366
        %387 = vmatprep.subr.mxu0 0.0
        %388 = vmatpush1.msra.mxu0 %v365
        %389 = vmatprep.subr.mxu0 0.0
        %390 = vmatpush1.msra.mxu0 %v364
        %391 = vmatprep.subr.mxu0 0.0
        %392 = vmatpush1.msra.mxu0 %v363
        %393 = vmatprep.subr.mxu0 0.0
        %394 = vmatpush1.msra.mxu0 %v362
        %395 = vmatprep.subr.mxu0 0.0
        %396 = vmatpush1.msra.mxu0 %v361
        %397 = vmatprep.subr.mxu0 0.0
        %398 = vmatpush1.msra.mxu0 %v360
        %399 = vmatprep.subr.mxu0 0.0
        %400 = vmatpush1.msra.mxu0 %v359
        %401 = vmatprep.subr.mxu0 0.0
        %402 = vmatpush1.msra.mxu0 %v358
        %403 = vmatprep.subr.mxu0 0.0
        %404 = vmatpush1.msra.mxu0 %v357
        %405 = vmatprep.subr.mxu0 0.0
        %406 = vmatpush2.msra.mxu0 0.0
        %407 = vmatprep.subr.mxu0 0.0
        %408 = vmatpush2.msra.mxu0 0.0
        %409 = vmatprep.subr.mxu0 0.0
        %410 = vmatpush2.msra.mxu0 0.0
        %411 = vmatprep.subr.mxu0 0.0
        %412 = vmatpush2.msra.mxu0 0.0
        %413 = vmatprep.subr.mxu0 0.0
        %414 = vmatpush2.msra.mxu0 0.0
        %415 = vmatprep.subr.mxu0 0.0
        %416 = vmatpush2.msra.mxu0 0.0
        %417 = vmatprep.subr.mxu0 0.0
        %418 = vmatpush2.msra.mxu0 0.0
        %419 = vmatprep.subr.mxu0 0.0
        %420 = vmatpush2.msra.mxu0 0.0
        %421 = vmatprep.subr.mxu0 0.0
        %422 = vmatpush2.msra.mxu0 0.0
        %423 = vmatprep.subr.mxu0 0.0
        %424 = vmatpush2.msra.mxu0 0.0
        %425 = vmatprep.subr.mxu0 0.0
        %426 = vmatpush2.msra.mxu0 0.0
        %427 = vmatprep.subr.mxu0 0.0
        %428 = vmatpush2.msra.mxu0 0.0
        %429 = vmatprep.subr.mxu0 0.0
        %430 = vmatpush2.msra.mxu0 0.0
        %431 = vmatprep.subr.mxu0 0.0
        %432 = vmatpush2.msra.mxu0 0.0
        %433 = vmatprep.subr.mxu0 0.0
        %434 = vmatpush2.msra.mxu0 0.0
        %435 = vmatprep.subr.mxu0 0.0
        %436 = vmatpush2.msra.mxu0 0.0
        %437 = vmatprep.mubr.f32.mxu0 0.0
        %438 = vmatmul.mubr.f32.gmra.mxu0 %v355
        %v439 = vpop.f32.mrf.mxu0
        %v440 = vadd.f32 0.0, %v439
        %v441 = vpop.f32.mrf.mxu0
        %442 = vdwg.mxu0
        %v443 = vadd.f32 %v356, %v440
        %444 = vst [vmem:[#allocation2] sm:$0xff] %v443
        %v445 = vld [vmem:[%s344] sm:$0xff]
        %v446 = vld [vmem:[%s344 + $0x8] sm:$0xff]
        %v447 = vld [vmem:[%s344 + $0x10] sm:$0xff]
        %v448 = vld [vmem:[%s344 + $0x18] sm:$0xff]
        %v449 = vld [vmem:[%s344 + $0x20] sm:$0xff]
        %v450 = vld [vmem:[%s344 + $0x28] sm:$0xff]
        %v451 = vld [vmem:[%s344 + $0x30] sm:$0xff]
        %v452 = vld [vmem:[%s344 + $0x38] sm:$0xff]
        %v453 = vld [vmem:[%s344 + $0x40] sm:$0xff]
        %v454 = vld [vmem:[%s344 + $0x48] sm:$0xff]
        %v455 = vld [vmem:[%s344 + $0x50] sm:$0xff]
        %v456 = vld [vmem:[%s344 + $0x58] sm:$0xff]
        %v457 = vld [vmem:[%s344 + $0x60] sm:$0xff]
        %v458 = vld [vmem:[%s344 + $0x68] sm:$0xff]
        %v459 = vld [vmem:[%s344 + $0x70] sm:$0xff]
        %v460 = vld [vmem:[%s344 + $0x78] sm:$0xff]
        %461 = vmatprep.subr.mxu0 0.0
        %462 = vmatpush1.msra.mxu0 %v460
        %463 = vmatprep.subr.mxu0 0.0
        %464 = vmatpush1.msra.mxu0 %v459
        %465 = vmatprep.subr.mxu0 0.0
        %466 = vmatpush1.msra.mxu0 %v458
        %467 = vmatprep.subr.mxu0 0.0
        %468 = vmatpush1.msra.mxu0 %v457
        %469 = vmatprep.subr.mxu0 0.0
        %470 = vmatpush1.msra.mxu0 %v456
        %471 = vmatprep.subr.mxu0 0.0
        %472 = vmatpush1.msra.mxu0 %v455
        %473 = vmatprep.subr.mxu0 0.0
        %474 = vmatpush1.msra.mxu0 %v454
        %475 = vmatprep.subr.mxu0 0.0
        %476 = vmatpush1.msra.mxu0 %v453
        %477 = vmatprep.subr.mxu0 0.0
        %478 = vmatpush1.msra.mxu0 %v452
        %479 = vmatprep.subr.mxu0 0.0
        %480 = vmatpush1.msra.mxu0 %v451
        %481 = vmatprep.subr.mxu0 0.0
        %482 = vmatpush1.msra.mxu0 %v450
        %483 = vmatprep.subr.mxu0 0.0
        %484 = vmatpush1.msra.mxu0 %v449
        %485 = vmatprep.subr.mxu0 0.0
        %486 = vmatpush1.msra.mxu0 %v448
        %487 = vmatprep.subr.mxu0 0.0
        %488 = vmatpush1.msra.mxu0 %v447
        %489 = vmatprep.subr.mxu0 0.0
        %490 = vmatpush1.msra.mxu0 %v446
        %491 = vmatprep.subr.mxu0 0.0
        %492 = vmatpush1.msra.mxu0 %v445
        %493 = vmatprep.subr.mxu0 0.0
        %494 = vmatpush2.msra.mxu0 0.0
        %495 = vmatprep.subr.mxu0 0.0
        %496 = vmatpush2.msra.mxu0 0.0
        %497 = vmatprep.subr.mxu0 0.0
        %498 = vmatpush2.msra.mxu0 0.0
        %499 = vmatprep.subr.mxu0 0.0
        %500 = vmatpush2.msra.mxu0 0.0
        %501 = vmatprep.subr.mxu0 0.0
        %502 = vmatpush2.msra.mxu0 0.0
        %503 = vmatprep.subr.mxu0 0.0
        %504 = vmatpush2.msra.mxu0 0.0
        %505 = vmatprep.subr.mxu0 0.0
        %506 = vmatpush2.msra.mxu0 0.0
        %507 = vmatprep.subr.mxu0 0.0
        %508 = vmatpush2.msra.mxu0 0.0
        %509 = vmatprep.subr.mxu0 0.0
        %510 = vmatpush2.msra.mxu0 0.0
        %511 = vmatprep.subr.mxu0 0.0
        %512 = vmatpush2.msra.mxu0 0.0
        %513 = vmatprep.subr.mxu0 0.0
        %514 = vmatpush2.msra.mxu0 0.0
        %515 = vmatprep.subr.mxu0 0.0
        %516 = vmatpush2.msra.mxu0 0.0
        %517 = vmatprep.subr.mxu0 0.0
        %518 = vmatpush2.msra.mxu0 0.0
        %519 = vmatprep.subr.mxu0 0.0
        %520 = vmatpush2.msra.mxu0 0.0
        %521 = vmatprep.subr.mxu0 0.0
        %522 = vmatpush2.msra.mxu0 0.0
        %523 = vmatprep.subr.mxu0 0.0
        %524 = vmatpush2.msra.mxu0 0.0
        %525 = vmatprep.mubr.f32.mxu0 0.0
        %526 = vmatmul.mubr.f32.gmra.mxu0 %v355
        %v527 = vpop.f32.mrf.mxu0
        %v528 = vadd.f32 0.0, %v527
        %v529 = vpop.f32.mrf.mxu0
        %530 = vdwg.mxu0
        %v531 = vld [vmem:[#allocation2] sm:$0xff]
        %v532 = vld [vmem:[%s349] sm:$0xf]
        %vm533 = vcmask 31744
        %v535 = vsel %vm533, %v528, 0
        %vm537 = vcmask 1043456
        %v539 = vsel %vm537, %v532, 0
        %541 = vmatprep.subr.mxu0 0.0
        %542 = vmatpush1.msra.mxu0 0.0
        %543 = vmatprep.subr.mxu0 0.0
        %544 = vmatpush1.msra.mxu0 0.0
        %545 = vmatprep.subr.mxu0 0.0
        %546 = vmatpush1.msra.mxu0 0.0
        %547 = vmatprep.subr.mxu0 0.0
        %548 = vmatpush1.msra.mxu0 0.0
        %549 = vmatprep.subr.mxu0 0.0
        %550 = vmatpush1.msra.mxu0 0.0
        %551 = vmatprep.subr.mxu0 0.0
        %552 = vmatpush1.msra.mxu0 0.0
        %553 = vmatprep.subr.mxu0 0.0
        %554 = vmatpush1.msra.mxu0 0.0
        %555 = vmatprep.subr.mxu0 0.0
        %556 = vmatpush1.msra.mxu0 0.0
        %557 = vmatprep.subr.mxu0 0.0
        %558 = vmatpush1.msra.mxu0 0.0
        %559 = vmatprep.subr.mxu0 0.0
        %560 = vmatpush1.msra.mxu0 0.0
        %561 = vmatprep.subr.mxu0 0.0
        %562 = vmatpush1.msra.mxu0 0.0
        %563 = vmatprep.subr.mxu0 0.0
        %564 = vmatpush1.msra.mxu0 0.0
        %565 = vmatprep.subr.mxu0 0.0
        %566 = vmatpush1.msra.mxu0 0.0
        %567 = vmatprep.subr.mxu0 0.0
        %568 = vmatpush1.msra.mxu0 0.0
        %569 = vmatprep.subr.mxu0 0.0
        %570 = vmatpush1.msra.mxu0 0.0
        %571 = vmatprep.subr.mxu0 0.0
        %572 = vmatpush1.msra.mxu0 %v539
        %573 = vmatprep.subr.mxu0 0.0
        %574 = vmatpush2.msra.mxu0 0.0
        %575 = vmatprep.subr.mxu0 0.0
        %576 = vmatpush2.msra.mxu0 0.0
        %577 = vmatprep.subr.mxu0 0.0
        %578 = vmatpush2.msra.mxu0 0.0
        %579 = vmatprep.subr.mxu0 0.0
        %580 = vmatpush2.msra.mxu0 0.0
        %581 = vmatprep.subr.mxu0 0.0
        %582 = vmatpush2.msra.mxu0 0.0
        %583 = vmatprep.subr.mxu0 0.0
        %584 = vmatpush2.msra.mxu0 0.0
        %585 = vmatprep.subr.mxu0 0.0
        %586 = vmatpush2.msra.mxu0 0.0
        %587 = vmatprep.subr.mxu0 0.0
        %588 = vmatpush2.msra.mxu0 0.0
        %589 = vmatprep.subr.mxu0 0.0
        %590 = vmatpush2.msra.mxu0 0.0
        %591 = vmatprep.subr.mxu0 0.0
        %592 = vmatpush2.msra.mxu0 0.0
        %593 = vmatprep.subr.mxu0 0.0
        %594 = vmatpush2.msra.mxu0 0.0
        %595 = vmatprep.subr.mxu0 0.0
        %596 = vmatpush2.msra.mxu0 0.0
        %597 = vmatprep.subr.mxu0 0.0
        %598 = vmatpush2.msra.mxu0 0.0
        %599 = vmatprep.subr.mxu0 0.0
        %600 = vmatpush2.msra.mxu0 0.0
        %601 = vmatprep.subr.mxu0 0.0
        %602 = vmatpush2.msra.mxu0 0.0
        %603 = vmatprep.subr.mxu0 0.0
        %604 = vmatpush2.msra.mxu0 0.0
        %605 = vmatprep.mubr.f32.mxu0 0.0
        %606 = vmatmul.mubr.f32.gmra.mxu0 %v535
        %v607 = vpop.f32.mrf.mxu0
        %v608 = vadd.f32 0.0, %v607
        %v609 = vpop.f32.mrf.mxu0
        %610 = vdwg.mxu0
        %v611 = vadd.f32 %v531, %v608
        %612 = vst [vmem:[#allocation2] sm:$0xff] %v611
        // Predicated region
        $region49: #{tpu_custom_call.1} parent=39 // pred_check
          %p613 = pneg %p350
        $region50: #{tpu_custom_call.1} parent=39 // pred_check_branch
          %615 = sbr.rel (%p613) target = $region52
        $region51: #{tpu_custom_call.1} parent=39 // pred_region
          %v616 = vld [vmem:[#allocation2] sm:$0xff]
          %v617 = vld [vmem:[%s339] sm:$0x1]
          %v619 = vlaneseq
          %v620 = vshrl.u32 %v619, 7
          %v621 = vsub.s32 0, %v620
          %v622 = vrot.slane %v617, %v621
          %v624 = vadd.f32 %v616, %v622
          %625 = vst [vmem:[%s327] sm:$0xff] %v624
        $region52: #{tpu_custom_call.1} parent=39 // pred_fallthru
          _
        %s626 = sand.u32 %s185, 1
        %s627 = scalar_lea.sflag [#allocation5], %s626
        %s628 = sand.u32 %s185, 1
        %s629 = smul.addr %s628, 8
        %s630 = scalar_lea.vmem [#allocation6], %s629
        // Predicated region
        $region53: #{tpu_custom_call.1} parent=39 // pred_check
          %p631 = pneg %p195
        $region54: #{tpu_custom_call.1} parent=39 // pred_check_branch
          %633 = sbr.rel (%p631) target = $region56
        $region55: #{tpu_custom_call.1} parent=39 // pred_region
          %s635 = ssub.s32 128, 128
          %636 = vsyncadd %s627, %s635
          %s637 = sadd.s32 %s27, %s28
          %s638 = smul.addr %s637, 128
          %s639 = scalar_lea.hbm %s5, %s638
          %s641 = sshll.u32 %s630, 4
          %s642 = int_to_ptr.vmem [resolvable:$true] %s641
          %644 = dma.vmem_to_hbm [thread:$0]  %s642, 128, %s639, %s627
        $region56: #{tpu_custom_call.1} parent=39 // pred_fallthru
          _
      $region40: #{tpu_custom_call.1} parent=5 // pred_fallthru
        _
      %p645 = scmp.le.s32.totalorder 2, %s17
      // Predicated region
      $region57: #{tpu_custom_call.1} parent=5 // pred_check
        %p646 = pneg %p645
      $region58: #{tpu_custom_call.1} parent=5 // pred_check_branch
        %648 = sbr.rel (%p646) target = $region60
      $region59: #{tpu_custom_call.1} parent=5 // pred_region
        %s649 = ssub.s32 %s17, 2
        // Predicated region
        $region61: #{tpu_custom_call.1} parent=59 // pred_check
          %p650 = pneg %p201
        $region62: #{tpu_custom_call.1} parent=59 // pred_check_branch
          %652 = sbr.rel (%p650) target = $region64
        $region63: #{tpu_custom_call.1} parent=59 // pred_region
          %s653 = sand.u32 %s186, 1
          %s654 = scalar_lea.sflag [#allocation5], %s653
          %s655 = sand.u32 %s186, 1
          %s656 = smul.addr %s655, 8
          %s657 = scalar_lea.vmem [#allocation6], %s656
          %658 = dma.done %s654, 128
        $region64: #{tpu_custom_call.1} parent=59 // pred_fallthru
          _
      $region60: #{tpu_custom_call.1} parent=5 // pred_fallthru
        _
    $region6: #{tpu_custom_call.1} parent=1 // loop_footer
      %s21 = sadd.s32 1, %s17
    $region7: #{tpu_custom_call.1} parent=1 // loop_footer_branch
      %16 = sbr.rel target = $region3
    $region8: #{tpu_custom_call.1} parent=1 // loop_exit
      _
    %659 = vsyncpa [#allocation4], 1
    %s660 = scalar_lea.sflag [#allocation4], 1
    %661 = vsyncpa %s660, 1
    %662 = vsyncpa [#allocation5], 1
    %s663 = scalar_lea.sflag [#allocation5], 1
    %664 = vsyncpa %s663, 1

</llo_original>
